<compile_context>
chip_gen: v6e
topology: v6e:2x2x1
jax: 0.10.0
libtpu: 0.0.40
codegen_flags: <defaults>
</compile_context>

<pallas_src>
import math
from functools import partial

import numpy as np
import jax
import jax.numpy as jnp
from jax.experimental import pallas as pl
from jax.experimental.pallas import tpu as pltpu


def _upsample_conv_kernel(xp_ref, t_ref, b_ref, o_ref, *, H, Ke):
    """One batch element: banded-matmul formulation of repeat+PixelShuffle+conv.

    xp_ref: (1, H+Ke-1, W*C)     H-padded activation, W and C folded on the lane axis
    t_ref : (Ke*W*C, W*4*Cout)   banded weight matrix (width taps + W-padding folded in)
    b_ref : (1, W*4*Cout)        bias broadcast row
    o_ref : (1, H, W*4*Cout)     all W positions x 4 phases x Cout, lane-dense
    """
    xp = xp_ref[0]                                    # (Hp, W*C)
    # im2col: LHS row h = rows h .. h+Ke-1 of the padded slab, laid side by side on lanes.
    parts = [xp[rh:rh + H, :] for rh in range(Ke)]
    lhs = parts[0] if Ke == 1 else jnp.concatenate(parts, axis=-1)   # (H, Ke*W*C)
    # Single MXU dot, f32 accumulation.  Default MXU f32 precision (same as the previous
    # version); pass precision=jax.lax.Precision.HIGHEST here for bit-closer parity with
    # the f32 reference at the cost of extra MXU passes.
    acc = jnp.dot(lhs, t_ref[...], preferred_element_type=jnp.float32)  # (H, W*4*Cout)
    o_ref[0] = (acc + b_ref[...]).astype(o_ref.dtype)


def _phase_taps(weight, C, K):
    """Collapse repeat(4) + PixelShuffle(2) + KxK conv into effective taps acting on the
    ORIGINAL HxW input.  Returns (E, Ke, L) with E of shape (Ke, Ke, C, 4*Cout) indexed
    (tap row, tap col, source channel, merged (pi,pj,cout) output)."""
    Cout = weight.shape[0]
    p = (K - 1) // 2
    offs = [(phi + d - p) // 2 for phi in (0, 1) for d in range(K)]
    L, R = -min(offs), max(offs)
    Ke = L + R + 1

    # Static 0/1 selection tensor (numpy, trace time): conv tap (dh, dw) on PixelShuffle
    # channel ci at output phase (pi, pj) becomes effective tap (rh, rw) on source channel
    # cx of the original input (channel map of repeat((1,4,1,1)) + PixelShuffle(2)).
    S = np.zeros((2, 2, K, K, Ke, Ke, C, C), np.float32)
    for pi in range(2):
        for pj in range(2):
            for dh in range(K):
                for dw in range(K):
                    sh, sw = pi + dh - p, pj + dw - p
                    rh, rw = sh // 2 + L, sw // 2 + L
                    ih, iw = sh % 2, sw % 2
                    for ci in range(C):
                        cx = (4 * ci + 2 * ih + iw) % C
                        S[pi, pj, dh, dw, rh, rw, ci, cx] += 1.0

    E = jnp.einsum("pqhwuvic,oihw->uvcpqo", jnp.asarray(S), weight,
                   precision=jax.lax.Precision.HIGHEST)       # (Ke, Ke, C, 2, 2, Cout)
    return E.reshape(Ke, Ke, C, 4 * Cout), Ke, L


def _band_matrix(E, W, Ke, L):
    """Fold the width taps and the 'same' W-padding into a banded RHS of shape
    (Ke*W*C, W*P): rows indexed (rh, w_in, c_src), cols indexed (w_out, phase, cout)."""
    _, _, C, P = E.shape
    D = np.zeros((Ke, W, W), np.float32)          # D[rw, w_in, w_out] = 1 iff w_in = w_out+rw-L
    for rw in range(Ke):
        for w in range(W):
            wi = w + rw - L
            if 0 <= wi < W:                       # out-of-range taps == zero padding in W
                D[rw, wi, w] = 1.0
    T = jnp.einsum("rvw,qrcp->qvcwp", jnp.asarray(D), E,
                   precision=jax.lax.Precision.HIGHEST)        # (Ke, W, C, W, P)
    return T.reshape(Ke * W * C, W * P)


def upsample_conv(x, weight, bias, k_size):
    """Forward of UpsampleConv.

    x:      (N, C, H, W)       NCHW, like PyTorch
    weight: (Cout, C, K, K)    OIHW, like nn.Conv2d
    bias:   (Cout,)
    returns (N, Cout, 2H, 2W)  NCHW
    """
    N, C, H, W = x.shape
    Cout = weight.shape[0]
    assert weight.shape[1] == C
    assert k_size % 2 == 1, "module implies odd kernel size ('same' padding)"

    E, Ke, L = _phase_taps(weight, C, k_size)
    Rpad = Ke - 1 - L
    P = 4 * Cout
    T = _band_matrix(E, W, Ke, L)                          # (Ke*W*C, W*P), HBM-resident
    b_row = jnp.tile(bias, 4 * W).reshape(1, W * P)        # bias per (w, phase, cout) lane

    # Lane-dense activation layout (H, W*C); only the H 'same' padding is materialized
    # (Ke-1 zero rows) -- the W padding lives in the band matrix, and the 4x upsampled
    # image never exists in HBM or VMEM.
    x_lay = jnp.transpose(x, (0, 2, 3, 1)).reshape(N, H, W * C)
    x_pad = jnp.pad(x_lay, ((0, 0), (L, Rpad), (0, 0)))    # (N, Hp, W*C)
    Hp = H + Ke - 1

    kernel = partial(_upsample_conv_kernel, H=H, Ke=Ke)
    out_flat = pl.pallas_call(
        kernel,
        out_shape=jax.ShapeDtypeStruct((N, H, W * P), x.dtype),
        grid_spec=pltpu.PrefetchScalarGridSpec(
            num_scalar_prefetch=0,
            grid=(N,),
            in_specs=[
                pl.BlockSpec((1, Hp, W * C), lambda n: (n, 0, 0)),
                pl.BlockSpec((Ke * W * C, W * P), lambda n: (0, 0)),  # resident across grid
                pl.BlockSpec((1, W * P), lambda n: (0, 0)),           # resident across grid
            ],
            out_specs=pl.BlockSpec((1, H, W * P), lambda n: (n, 0, 0)),
        ),
        compiler_params=pltpu.CompilerParams(dimension_semantics=("parallel",)),
    )(x_pad, T, b_row)

    # Decode lanes (w, pi, pj, cout): (N, H, W*P) -> (N, 2H, 2W, Cout) -> NCHW.
    out = out_flat.reshape(N, H, W, 2, 2, Cout)
    out = jnp.transpose(out, (0, 1, 3, 2, 4, 5)).reshape(N, 2 * H, 2 * W, Cout)
    return jnp.transpose(out, (0, 3, 1, 2))


if __name__ == "__main__":
    key = jax.random.PRNGKey(0)
    k1, k2, k3 = jax.random.split(key, 3)

    N, H, W = 2, 16, 16
    n_input, n_output, k_size = 4, 8, 3

    x = jax.random.normal(k1, (N, n_input, H, W), jnp.float32)

    # deterministic nn.Conv2d-style init: U(-1/sqrt(fan_in), 1/sqrt(fan_in))
    fan_in = n_input * k_size * k_size
    bound = 1.0 / math.sqrt(fan_in)
    weight = jax.random.uniform(
        k2, (n_output, n_input, k_size, k_size), jnp.float32, -bound, bound)
    bias = jax.random.uniform(k3, (n_output,), jnp.float32, -bound, bound)

    out = jax.block_until_ready(upsample_conv(x, weight, bias, k_size))
    assert out.shape == (N, n_output, 2 * H, 2 * W)

    # pure-JAX reference of the original module semantics:
    # repeat((1,4,1,1)) -> PixelShuffle(2) -> Conv2d(k, stride 1, same pad) + bias
    r = 2
    x_rep = jnp.tile(x, (1, 4, 1, 1))
    y_ref = x_rep.reshape(N, n_input, r, r, H, W)
    y_ref = jnp.transpose(y_ref, (0, 1, 4, 2, 5, 3)).reshape(N, n_input, H * r, W * r)
    pad = (k_size - 1) // 2
    ref = jax.lax.conv_general_dilated(
        y_ref, weight, window_strides=(1, 1),
        padding=[(pad, pad), (pad, pad)],
        dimension_numbers=("NCHW", "OIHW", "NCHW"),
        precision=jax.lax.Precision.HIGHEST,
    ) + bias[None, :, None, None]

    assert jnp.allclose(out, ref, atol=1e-3, rtol=1e-3), "mismatch vs reference"
    print("KERNEL_OK")
</pallas_src>

<mosaic_0001>
module attributes {stable_mosaic.version = 11 : i64} {
  func.func @_upsample_conv_kernel(%arg0: i32, %arg1: memref<1x18x64xf32, #tpu.memory_space<vmem>>, %arg2: memref<192x512xf32, #tpu.memory_space<vmem>>, %arg3: memref<1x512xf32, #tpu.memory_space<vmem>>, %arg4: memref<1x16x512xf32, #tpu.memory_space<vmem>>) attributes {dimension_semantics = [#tpu.dimension_semantics<parallel>], iteration_bounds = array<i64: 2>, scalar_prefetch = 0 : i64, scratch_operands = 0 : i64, tpu.core_type = #tpu.core_type<tc>, window_params = [{transform_indices = @transform_0, window_bounds = array<i64: 1, 18, 64>}, {pipeline_mode = #tpu.pipeline_mode<synchronous>, transform_indices = @transform_1, window_bounds = array<i64: 192, 512>}, {pipeline_mode = #tpu.pipeline_mode<synchronous>, transform_indices = @transform_2, window_bounds = array<i64: 1, 512>}, {transform_indices = @transform_3, window_bounds = array<i64: 1, 16, 512>}]} {
    %c0 = arith.constant 0 : index
    %c0_0 = arith.constant 0 : index
    %c0_1 = arith.constant 0 : index
    %0 = vector.load %arg1[%c0, %c0_0, %c0_1] : memref<1x18x64xf32, #tpu.memory_space<vmem>>, vector<1x18x64xf32>
    %1 = vector.shape_cast %0 : vector<1x18x64xf32> to vector<18x64xf32>
    %2 = vector.extract_strided_slice %1 {offsets = [0, 0], sizes = [16, 64], strides = [1, 1]} : vector<18x64xf32> to vector<16x64xf32>
    %3 = vector.extract_strided_slice %1 {offsets = [1, 0], sizes = [16, 64], strides = [1, 1]} : vector<18x64xf32> to vector<16x64xf32>
    %4 = vector.extract_strided_slice %1 {offsets = [2, 0], sizes = [16, 64], strides = [1, 1]} : vector<18x64xf32> to vector<16x64xf32>
    %5 = tpu.concatenate %2, %3, %4 in 1 : vector<16x64xf32>, vector<16x64xf32>, vector<16x64xf32> -> vector<16x192xf32>
    %c0_2 = arith.constant 0 : index
    %c0_3 = arith.constant 0 : index
    %6 = vector.load %arg2[%c0_2, %c0_3] : memref<192x512xf32, #tpu.memory_space<vmem>>, vector<192x512xf32>
    %cst = arith.constant dense<0.000000e+00> : vector<16x512xf32>
    %7 = tpu.matmul %5, %6, %cst {dimension_numbers = #tpu.dot_dimension_numbers<[1], [0], [0], [1], [0, 0, 1, 1], [], []>} : vector<16x192xf32>, vector<192x512xf32>, vector<16x512xf32> -> vector<16x512xf32>
    %c0_4 = arith.constant 0 : index
    %c0_5 = arith.constant 0 : index
    %8 = vector.load %arg3[%c0_4, %c0_5] : memref<1x512xf32, #tpu.memory_space<vmem>>, vector<1x512xf32>
    %9 = vector.broadcast %8 : vector<1x512xf32> to vector<16x512xf32>
    %10 = arith.addf %7, %9 : vector<16x512xf32>
    %c0_6 = arith.constant 0 : index
    %c0_7 = arith.constant 0 : index
    %c0_8 = arith.constant 0 : index
    %11 = vector.load %arg4[%c0_6, %c0_7, %c0_8] : memref<1x16x512xf32, #tpu.memory_space<vmem>>, vector<1x16x512xf32>
    %12 = vector.shape_cast %11 : vector<1x16x512xf32> to vector<16x512xf32>
    %13 = vector.shape_cast %10 : vector<16x512xf32> to vector<1x16x512xf32>
    tpu.vector_store %arg4[%c0_6, %c0_7, %c0_8], %13 {strides = array<i32>} : memref<1x16x512xf32, #tpu.memory_space<vmem>>, vector<1x16x512xf32>,
    return
  }
  func.func @transform_0(%arg0: i32) -> (i32, i32, i32) {
    %c0_i32 = arith.constant 0 : i32
    %c0_i32_0 = arith.constant 0 : i32
    %c0_i32_1 = arith.constant 0 : i32
    return %arg0, %c0_i32, %c0_i32_0 : i32, i32, i32
  }
  func.func @transform_1(%arg0: i32) -> (i32, i32) {
    %c0_i32 = arith.constant 0 : i32
    %c0_i32_0 = arith.constant 0 : i32
    %c0_i32_1 = arith.constant 0 : i32
    return %c0_i32, %c0_i32_0 : i32, i32
  }
  func.func @transform_2(%arg0: i32) -> (i32, i32) {
    %c0_i32 = arith.constant 0 : i32
    %c0_i32_0 = arith.constant 0 : i32
    %c0_i32_1 = arith.constant 0 : i32
    return %c0_i32, %c0_i32_0 : i32, i32
  }
  func.func @transform_3(%arg0: i32) -> (i32, i32, i32) {
    %c0_i32 = arith.constant 0 : i32
    %c0_i32_0 = arith.constant 0 : i32
    %c0_i32_1 = arith.constant 0 : i32
    return %arg0, %c0_i32, %c0_i32_0 : i32, i32, i32
  }
}

</mosaic_0001>

<llo_original>
// kernel: tpu_custom_call.1
$region0: #{tpu_custom_call.1}
  #allocation0 [shape = 'u32[]', space=smem, size = 0x4, offset = 0x4, fixed_abs, tag = 'smem constant byte address 0x4 - core index']
  #allocation1 [shape = 'u32[144,128]{1,0:T(1,128)}', space=vmem, size = 0x12000, scoped, tag = 'internal scratch']
  %s0 = inlined_call_operand.vmem [shape: f32[2,18,64], index: 0, kind: input, shape index: {}]
  %s1 = inlined_call_operand.hbm [shape: f32[192,512], index: 1, kind: input, shape index: {}]
  %s2 = inlined_call_operand.vmem [shape: f32[1,512], index: 2, kind: input, shape index: {}]
  %s3 = inlined_call_operand.hbm [shape: f32[2,16,512], index: 3, kind: output, shape index: {}]
  %s4 = sld [smem:[#allocation0]]
  $region49: #{tpu_custom_call.1} parent=0
    _
  %s6 = ssub.s32 1, %s4
  %s7 = scalar_select 0, %s6, %s4
  $region1: #{tpu_custom_call.1} parent=0
    #allocation2 [shape = 'u8[393216]{0}', space=vmem, size = 0x60000, scoped, tag = 'input window, operand 1, single buffered']
    #allocation3 [shape = 's32[2]{0}', space=sflag, size = 0x8, scoped, tag = 'scoped memory for tpu_custom_call.1']
    #allocation4 [shape = 's32[2]{0}', space=sflag, size = 0x8, scoped, tag = 'scoped memory for tpu_custom_call.1']
    #allocation5 [shape = 'u8[65536]{0}', space=vmem, size = 0x10000, scoped, tag = 'output window, operand 0']
    %8 = vsyncpa [#allocation3], 0
    %9 = vsyncpa [#allocation4], 0
    %s10 = scalar_lea.sflag [#allocation4], 1
    %11 = vsyncpa %s10, 0
    loop: start=0, step=1, limit=4
    $region2: #{tpu_custom_call.1} parent=1 // loop_pre_header
      _
    $region3: #{tpu_custom_call.1} parent=1 // loop_header
      %s13 = sphi 0, %s17
      %p14 = scmp.ge.s32.totalorder %s13, 4
      %s23 = sphi 0, %s25
      %s26 = sphi 0, %s23
      %s27 = sphi 0, %s26
      %s43 = sphi 0, %s27
      %s47 = sphi 0, %s47
      %s49 = sphi 0, %s47
      %s50 = sphi 0, %s49
      %s64 = sphi 0, %s50
      %s68 = sphi 0, %s68
      %s70 = sphi 0, %s68
      %s71 = sphi 0, %s70
      %s85 = sphi 0, %s71
      %s91 = sphi 0, %s93
      %s94 = sphi 0, %s91
      %s95 = sphi 0, %s94
      %s111 = sphi 0, %s95
    $region4: #{tpu_custom_call.1} parent=1 // loop_header_branch
      %16 = sbr.rel (%p14) target = $region8
    $region5: #{tpu_custom_call.1} parent=1 // loop_body
      %s18 = ssub.s32 %s13, 1
      %s19 = ssub.s32 %s13, 2
      %s20 = sadd.s32 %s13, 1
      %s21 = ssub.s32 %s13, %s20
      %p22 = scmp.eq.s32.totalorder %s21, 0
      %s24 = sadd.s32 %s23, 1
      %s25 = scalar_select %p22, %s23, %s24
      %p28 = pneg %p22
      %p29 = scmp.eq.s32.totalorder %s13, 1
      %p30 = por %p28, %p29
      %p31 = scmp.ne.s32.totalorder %s23, %s26
      %p32 = scmp.eq.s32.totalorder %s13, 0
      %p33 = por %p31, %p32
      %p34 = scmp.ne.s32.totalorder %s23, %s26
      %p35 = scmp.eq.s32.totalorder %s18, 1
      %p36 = por %p34, %p35
      %p37 = scmp.ne.s32.totalorder %s26, %s27
      %p38 = scmp.eq.s32.totalorder %s18, 0
      %p39 = por %p37, %p38
      %p40 = scmp.ne.s32.totalorder %s26, %s27
      %p41 = scmp.eq.s32.totalorder %s19, 1
      %p42 = por %p40, %p41
      %p44 = scmp.ne.s32.totalorder %s27, %s43
      %p45 = scmp.eq.s32.totalorder %s19, 0
      %p46 = por %p44, %p45
      %s48 = sadd.s32 %s47, 1
      %p51 = scmp.eq.s32.totalorder %s13, 1
      %p52 = scmp.ne.s32.totalorder %s47, %s49
      %p53 = scmp.eq.s32.totalorder %s13, 0
      %p54 = por %p52, %p53
      %p55 = scmp.ne.s32.totalorder %s47, %s49
      %p56 = scmp.eq.s32.totalorder %s18, 1
      %p57 = por %p55, %p56
      %p58 = scmp.ne.s32.totalorder %s49, %s50
      %p59 = scmp.eq.s32.totalorder %s18, 0
      %p60 = por %p58, %p59
      %p61 = scmp.ne.s32.totalorder %s49, %s50
      %p62 = scmp.eq.s32.totalorder %s19, 1
      %p63 = por %p61, %p62
      %p65 = scmp.ne.s32.totalorder %s50, %s64
      %p66 = scmp.eq.s32.totalorder %s19, 0
      %p67 = por %p65, %p66
      %s69 = sadd.s32 %s68, 1
      %p72 = scmp.eq.s32.totalorder %s13, 1
      %p73 = scmp.ne.s32.totalorder %s68, %s70
      %p74 = scmp.eq.s32.totalorder %s13, 0
      %p75 = por %p73, %p74
      %p76 = scmp.ne.s32.totalorder %s68, %s70
      %p77 = scmp.eq.s32.totalorder %s18, 1
      %p78 = por %p76, %p77
      %p79 = scmp.ne.s32.totalorder %s70, %s71
      %p80 = scmp.eq.s32.totalorder %s18, 0
      %p81 = por %p79, %p80
      %p82 = scmp.ne.s32.totalorder %s70, %s71
      %p83 = scmp.eq.s32.totalorder %s19, 1
      %p84 = por %p82, %p83
      %p86 = scmp.ne.s32.totalorder %s71, %s85
      %p87 = scmp.eq.s32.totalorder %s19, 0
      %p88 = por %p86, %p87
      %s89 = ssub.s32 %s13, %s20
      %p90 = scmp.eq.s32.totalorder %s89, 0
      %s92 = sadd.s32 %s91, 1
      %s93 = scalar_select %p90, %s91, %s92
      %p96 = pneg %p90
      %p97 = scmp.eq.s32.totalorder %s13, 1
      %p98 = por %p96, %p97
      %p99 = scmp.ne.s32.totalorder %s91, %s94
      %p100 = scmp.eq.s32.totalorder %s13, 0
      %p101 = por %p99, %p100
      %p102 = scmp.ne.s32.totalorder %s91, %s94
      %p103 = scmp.eq.s32.totalorder %s18, 1
      %p104 = por %p102, %p103
      %p105 = scmp.ne.s32.totalorder %s94, %s95
      %p106 = scmp.eq.s32.totalorder %s18, 0
      %p107 = por %p105, %p106
      %p108 = scmp.ne.s32.totalorder %s94, %s95
      %p109 = scmp.eq.s32.totalorder %s19, 1
      %p110 = por %p108, %p109
      %p112 = scmp.ne.s32.totalorder %s95, %s111
      %p113 = scmp.eq.s32.totalorder %s19, 0
      %p114 = por %p112, %p113
      %p115 = scmp.le.s32.totalorder 1, %s13
      %p116 = scmp.lt.s32.totalorder %s13, 3
      %p117 = pnand %p115, %p116
      %p118 = pneg %p117
      // Predicated region
      $region9: #{tpu_custom_call.1} parent=5 // pred_check
        _
      $region10: #{tpu_custom_call.1} parent=5 // pred_check_branch
        %120 = sbr.rel (%p117) target = $region12
      $region11: #{tpu_custom_call.1} parent=5 // pred_region
        %s121 = ssub.s32 %s13, 1
        // Predicated region
        $region13: #{tpu_custom_call.1} parent=11 // pred_check
          %p122 = pneg %p60
        $region14: #{tpu_custom_call.1} parent=11 // pred_check_branch
          %124 = sbr.rel (%p122) target = $region16
        $region15: #{tpu_custom_call.1} parent=11 // pred_region
          %s126 = ssub.s32 12288, 12288
          %127 = vsyncadd [#allocation3], %s126
          %s128 = sshll.u32 [#allocation2], 4
          %s129 = int_to_ptr.vmem [resolvable:$true] %s128
          %134 = dma.hbm_to_vmem [thread:$0]  %s1, 12288, %s129, [#allocation3], 512, 512, 32
        $region16: #{tpu_custom_call.1} parent=11 // pred_fallthru
          _
        // Predicated region
        $region17: #{tpu_custom_call.1} parent=11 // pred_check
          %p135 = pneg %p81
        $region18: #{tpu_custom_call.1} parent=11 // pred_check_branch
          %137 = sbr.rel (%p135) target = $region20
        $region19: #{tpu_custom_call.1} parent=11 // pred_region
          _
        $region20: #{tpu_custom_call.1} parent=11 // pred_fallthru
          _
      $region12: #{tpu_custom_call.1} parent=5 // pred_fallthru
        _
      %p138 = scmp.lt.s32.totalorder %s13, 2
      // Predicated region
      $region21: #{tpu_custom_call.1} parent=5 // pred_check
        %p139 = pneg %p138
      $region22: #{tpu_custom_call.1} parent=5 // pred_check_branch
        %141 = sbr.rel (%p139) target = $region24
      $region23: #{tpu_custom_call.1} parent=5 // pred_region
        // Predicated region
        $region25: #{tpu_custom_call.1} parent=23 // pred_check
          %p142 = pneg %p33
        $region26: #{tpu_custom_call.1} parent=23 // pred_check_branch
          %144 = sbr.rel (%p142) target = $region28
        $region27: #{tpu_custom_call.1} parent=23 // pred_region
          %p145 = scmp.lt.s32.totalorder %s13, 1
          %s146 = scalar_select %p145, %s13, 1
          %s147 = smul.addr %s146, 3
          %s148 = smul.addr %s147, 8
          %s149 = scalar_lea.vmem %s0, %s148
        $region28: #{tpu_custom_call.1} parent=23 // pred_fallthru
          _
      $region24: #{tpu_custom_call.1} parent=5 // pred_fallthru
        _
      %p150 = scmp.le.s32.totalorder 1, %s13
      %p151 = scmp.lt.s32.totalorder %s13, 3
      %p152 = pnand %p150, %p151
      %p153 = pneg %p152
      // Predicated region
      $region29: #{tpu_custom_call.1} parent=5 // pred_check
        _
      $region30: #{tpu_custom_call.1} parent=5 // pred_check_branch
        %155 = sbr.rel (%p152) target = $region32
      $region31: #{tpu_custom_call.1} parent=5 // pred_region
        %s156 = ssub.s32 %s13, 1
        // Predicated region
        $region33: #{tpu_custom_call.1} parent=31 // pred_check
          %p157 = pneg %p60
        $region34: #{tpu_custom_call.1} parent=31 // pred_check_branch
          %159 = sbr.rel (%p157) target = $region36
        $region35: #{tpu_custom_call.1} parent=31 // pred_region
          %160 = dma.done [#allocation3], 12288
        $region36: #{tpu_custom_call.1} parent=31 // pred_fallthru
          _
        %p161 = scmp.lt.s32.totalorder %s18, 1
        %s162 = scalar_select %p161, %s18, 1
        %s163 = smul.addr %s162, 3
        %s164 = smul.addr %s163, 8
        %s165 = scalar_lea.vmem %s0, %s164
        %p166 = pneg %p39
        %p167 = pneg %p36
        %p168 = pneg %p60
        %p169 = pneg %p57
        %p170 = pneg %p81
        %p171 = pneg %p78
        %p172 = pneg %p107
        %p173 = pneg %p104
        %s174 = sand.u32 %s94, 1
        %s175 = scalar_lea.sflag [#allocation4], %s174
        %s176 = sand.u32 %s94, 1
        %s177 = smul.addr %s176, 64
        %s178 = scalar_lea.vmem [#allocation5], %s177
        %p179 = scmp.lt.s32.totalorder %s18, 1
        %s180 = scalar_select %p179, %s18, 1
        %s181 = smul.addr %s180, 3
        %s182 = smul.addr %s181, 8
        %s183 = scalar_lea.vmem %s0, %s182
        %v184 = vld [vmem:[%s183] sm:$0xff]
        %v185 = vld [vmem:[%s183 + $0x8] sm:$0xff]
        %v186 = vld [vmem:[%s183 + $0x10] sm:$0x3]
        %vm190 = vcmask 1046528
        %v191 = vrot.slane %v184, 1
        %v192 = vrot.slane %v185, 1
        %v193 = vsel %vm190, %v191, %v192
        %v194 = vrot.slane %v186, 1
        %v195 = vsel %vm190, %v192, %v194
        %196 = vrot.lane.b32.xlu0 %v193, 64
        %v197 = vpop.permute.xlu0 %196
        %198 = vrot.lane.b32.xlu0 %v195, 64
        %v199 = vpop.permute.xlu0 %198
        %vm202 = vcmask 1045504
        %v203 = vrot.slane %v184, 2
        %v204 = vrot.slane %v185, 2
        %v205 = vsel %vm202, %v203, %v204
        %v206 = vrot.slane %v186, 2
        %v207 = vsel %vm202, %v204, %v206
        %vm208 = vcmask 523264
        %v209 = vsel %vm208, %v184, %v197
        %v210 = vsel %vm208, %v185, %v199
        %v211 = vld [vmem:[#allocation2] sm:$0xff]
        %v212 = vld [vmem:[#allocation2 + $0x8] sm:$0xff]
        %v213 = vld [vmem:[#allocation2 + $0x10] sm:$0xff]
        %v214 = vld [vmem:[#allocation2 + $0x18] sm:$0xff]
        %v215 = vld [vmem:[#allocation2 + $0x20] sm:$0xff]
        %v216 = vld [vmem:[#allocation2 + $0x28] sm:$0xff]
        %v217 = vld [vmem:[#allocation2 + $0x30] sm:$0xff]
        %v218 = vld [vmem:[#allocation2 + $0x38] sm:$0xff]
        %v219 = vld [vmem:[#allocation2 + $0x40] sm:$0xff]
        %v220 = vld [vmem:[#allocation2 + $0x48] sm:$0xff]
        %v221 = vld [vmem:[#allocation2 + $0x50] sm:$0xff]
        %v222 = vld [vmem:[#allocation2 + $0x58] sm:$0xff]
        %v223 = vld [vmem:[#allocation2 + $0x60] sm:$0xff]
        %v224 = vld [vmem:[#allocation2 + $0x68] sm:$0xff]
        %v225 = vld [vmem:[#allocation2 + $0x70] sm:$0xff]
        %v226 = vld [vmem:[#allocation2 + $0x78] sm:$0xff]
        %v227 = vld [vmem:[#allocation2 + $0x80] sm:$0xff]
        %v228 = vld [vmem:[#allocation2 + $0x88] sm:$0xff]
        %v229 = vld [vmem:[#allocation2 + $0x90] sm:$0xff]
        %v230 = vld [vmem:[#allocation2 + $0x98] sm:$0xff]
        %v231 = vld [vmem:[#allocation2 + $0xa0] sm:$0xff]
        %v232 = vld [vmem:[#allocation2 + $0xa8] sm:$0xff]
        %v233 = vld [vmem:[#allocation2 + $0xb0] sm:$0xff]
        %v234 = vld [vmem:[#allocation2 + $0xb8] sm:$0xff]
        %v235 = vld [vmem:[#allocation2 + $0xc0] sm:$0xff]
        %v236 = vld [vmem:[#allocation2 + $0xc8] sm:$0xff]
        %v237 = vld [vmem:[#allocation2 + $0xd0] sm:$0xff]
        %v238 = vld [vmem:[#allocation2 + $0xd8] sm:$0xff]
        %v239 = vld [vmem:[#allocation2 + $0xe0] sm:$0xff]
        %v240 = vld [vmem:[#allocation2 + $0xe8] sm:$0xff]
        %v241 = vld [vmem:[#allocation2 + $0xf0] sm:$0xff]
        %v242 = vld [vmem:[#allocation2 + $0xf8] sm:$0xff]
        %v243 = vld [vmem:[#allocation2 + $0x100] sm:$0xff]
        %v244 = vld [vmem:[#allocation2 + $0x108] sm:$0xff]
        %v245 = vld [vmem:[#allocation2 + $0x110] sm:$0xff]
        %v246 = vld [vmem:[#allocation2 + $0x118] sm:$0xff]
        %v247 = vld [vmem:[#allocation2 + $0x120] sm:$0xff]
        %v248 = vld [vmem:[#allocation2 + $0x128] sm:$0xff]
        %v249 = vld [vmem:[#allocation2 + $0x130] sm:$0xff]
        %v250 = vld [vmem:[#allocation2 + $0x138] sm:$0xff]
        %v251 = vld [vmem:[#allocation2 + $0x140] sm:$0xff]
        %v252 = vld [vmem:[#allocation2 + $0x148] sm:$0xff]
        %v253 = vld [vmem:[#allocation2 + $0x150] sm:$0xff]
        %v254 = vld [vmem:[#allocation2 + $0x158] sm:$0xff]
        %v255 = vld [vmem:[#allocation2 + $0x160] sm:$0xff]
        %v256 = vld [vmem:[#allocation2 + $0x168] sm:$0xff]
        %v257 = vld [vmem:[#allocation2 + $0x170] sm:$0xff]
        %v258 = vld [vmem:[#allocation2 + $0x178] sm:$0xff]
        %v259 = vld [vmem:[#allocation2 + $0x180] sm:$0xff]
        %v260 = vld [vmem:[#allocation2 + $0x188] sm:$0xff]
        %v261 = vld [vmem:[#allocation2 + $0x190] sm:$0xff]
        %v262 = vld [vmem:[#allocation2 + $0x198] sm:$0xff]
        %v263 = vld [vmem:[#allocation2 + $0x1a0] sm:$0xff]
        %v264 = vld [vmem:[#allocation2 + $0x1a8] sm:$0xff]
        %v265 = vld [vmem:[#allocation2 + $0x1b0] sm:$0xff]
        %v266 = vld [vmem:[#allocation2 + $0x1b8] sm:$0xff]
        %v267 = vld [vmem:[#allocation2 + $0x1c0] sm:$0xff]
        %v268 = vld [vmem:[#allocation2 + $0x1c8] sm:$0xff]
        %v269 = vld [vmem:[#allocation2 + $0x1d0] sm:$0xff]
        %v270 = vld [vmem:[#allocation2 + $0x1d8] sm:$0xff]
        %v271 = vld [vmem:[#allocation2 + $0x1e0] sm:$0xff]
        %v272 = vld [vmem:[#allocation2 + $0x1e8] sm:$0xff]
        %v273 = vld [vmem:[#allocation2 + $0x1f0] sm:$0xff]
        %v274 = vld [vmem:[#allocation2 + $0x1f8] sm:$0xff]
        %v275 = vld [vmem:[#allocation2 + $0x200] sm:$0xff]
        %v276 = vld [vmem:[#allocation2 + $0x208] sm:$0xff]
        %v277 = vld [vmem:[#allocation2 + $0x210] sm:$0xff]
        %v278 = vld [vmem:[#allocation2 + $0x218] sm:$0xff]
        %v279 = vld [vmem:[#allocation2 + $0x220] sm:$0xff]
        %v280 = vld [vmem:[#allocation2 + $0x228] sm:$0xff]
        %v281 = vld [vmem:[#allocation2 + $0x230] sm:$0xff]
        %v282 = vld [vmem:[#allocation2 + $0x238] sm:$0xff]
        %v283 = vld [vmem:[#allocation2 + $0x240] sm:$0xff]
        %v284 = vld [vmem:[#allocation2 + $0x248] sm:$0xff]
        %v285 = vld [vmem:[#allocation2 + $0x250] sm:$0xff]
        %v286 = vld [vmem:[#allocation2 + $0x258] sm:$0xff]
        %v287 = vld [vmem:[#allocation2 + $0x260] sm:$0xff]
        %v288 = vld [vmem:[#allocation2 + $0x268] sm:$0xff]
        %v289 = vld [vmem:[#allocation2 + $0x270] sm:$0xff]
        %v290 = vld [vmem:[#allocation2 + $0x278] sm:$0xff]
        %v291 = vld [vmem:[#allocation2 + $0x280] sm:$0xff]
        %v292 = vld [vmem:[#allocation2 + $0x288] sm:$0xff]
        %v293 = vld [vmem:[#allocation2 + $0x290] sm:$0xff]
        %v294 = vld [vmem:[#allocation2 + $0x298] sm:$0xff]
        %v295 = vld [vmem:[#allocation2 + $0x2a0] sm:$0xff]
        %v296 = vld [vmem:[#allocation2 + $0x2a8] sm:$0xff]
        %v297 = vld [vmem:[#allocation2 + $0x2b0] sm:$0xff]
        %v298 = vld [vmem:[#allocation2 + $0x2b8] sm:$0xff]
        %v299 = vld [vmem:[#allocation2 + $0x2c0] sm:$0xff]
        %v300 = vld [vmem:[#allocation2 + $0x2c8] sm:$0xff]
        %v301 = vld [vmem:[#allocation2 + $0x2d0] sm:$0xff]
        %v302 = vld [vmem:[#allocation2 + $0x2d8] sm:$0xff]
        %v303 = vld [vmem:[#allocation2 + $0x2e0] sm:$0xff]
        %v304 = vld [vmem:[#allocation2 + $0x2e8] sm:$0xff]
        %v305 = vld [vmem:[#allocation2 + $0x2f0] sm:$0xff]
        %v306 = vld [vmem:[#allocation2 + $0x2f8] sm:$0xff]
        %v307 = vld [vmem:[%s2] sm:$0xf]
        %v309 = vlaneseq
        %v310 = vshrl.u32 %v309, 7
        %v311 = vsub.s32 0, %v310
        %v312 = vrot.slane %v307, %v311
        %v313 = vlaneseq
        %v314 = vshrl.u32 %v313, 7
        %v315 = vsub.s32 1, %v314
        %v316 = vrot.slane %v307, %v315
        %v317 = vlaneseq
        %v318 = vshrl.u32 %v317, 7
        %v319 = vsub.s32 2, %v318
        %v320 = vrot.slane %v307, %v319
        %v321 = vlaneseq
        %v322 = vshrl.u32 %v321, 7
        %v323 = vsub.s32 3, %v322
        %v324 = vrot.slane %v307, %v323
        %v329 = vsel %vm208, %v205, 0
        %v331 = vsel %vm208, %v207, 0
        %333 = vmatprep.subr.mxu0 %v272
        %334 = vmatpush1.msra.mxu0 %v271
        %335 = vmatprep.subr.mxu0 %v268
        %336 = vmatpush1.msra.mxu0 %v267
        %337 = vmatprep.subr.mxu0 %v264
        %338 = vmatpush1.msra.mxu0 %v263
        %339 = vmatprep.subr.mxu0 %v260
        %340 = vmatpush1.msra.mxu0 %v259
        %341 = vmatprep.subr.mxu0 %v256
        %342 = vmatpush1.msra.mxu0 %v255
        %343 = vmatprep.subr.mxu0 %v252
        %344 = vmatpush1.msra.mxu0 %v251
        %345 = vmatprep.subr.mxu0 %v248
        %346 = vmatpush1.msra.mxu0 %v247
        %347 = vmatprep.subr.mxu0 %v244
        %348 = vmatpush1.msra.mxu0 %v243
        %349 = vmatprep.subr.mxu0 %v240
        %350 = vmatpush1.msra.mxu0 %v239
        %351 = vmatprep.subr.mxu0 %v236
        %352 = vmatpush1.msra.mxu0 %v235
        %353 = vmatprep.subr.mxu0 %v232
        %354 = vmatpush1.msra.mxu0 %v231
        %355 = vmatprep.subr.mxu0 %v228
        %356 = vmatpush1.msra.mxu0 %v227
        %357 = vmatprep.subr.mxu0 %v224
        %358 = vmatpush1.msra.mxu0 %v223
        %359 = vmatprep.subr.mxu0 %v220
        %360 = vmatpush1.msra.mxu0 %v219
        %361 = vmatprep.subr.mxu0 %v216
        %362 = vmatpush1.msra.mxu0 %v215
        %363 = vmatprep.subr.mxu0 %v212
        %364 = vmatpush1.msra.mxu0 %v211
        %365 = vmatprep.subr.mxu0 0.0
        %366 = vmatpush2.msra.mxu0 0.0
        %367 = vmatprep.subr.mxu0 0.0
        %368 = vmatpush2.msra.mxu0 0.0
        %369 = vmatprep.subr.mxu0 0.0
        %370 = vmatpush2.msra.mxu0 0.0
        %371 = vmatprep.subr.mxu0 0.0
        %372 = vmatpush2.msra.mxu0 0.0
        %373 = vmatprep.subr.mxu0 0.0
        %374 = vmatpush2.msra.mxu0 0.0
        %375 = vmatprep.subr.mxu0 0.0
        %376 = vmatpush2.msra.mxu0 0.0
        %377 = vmatprep.subr.mxu0 0.0
        %378 = vmatpush2.msra.mxu0 0.0
        %379 = vmatprep.subr.mxu0 0.0
        %380 = vmatpush2.msra.mxu0 0.0
        %381 = vmatprep.subr.mxu0 %v304
        %382 = vmatpush2.msra.mxu0 %v303
        %383 = vmatprep.subr.mxu0 %v300
        %384 = vmatpush2.msra.mxu0 %v299
        %385 = vmatprep.subr.mxu0 %v296
        %386 = vmatpush2.msra.mxu0 %v295
        %387 = vmatprep.subr.mxu0 %v292
        %388 = vmatpush2.msra.mxu0 %v291
        %389 = vmatprep.subr.mxu0 %v288
        %390 = vmatpush2.msra.mxu0 %v287
        %391 = vmatprep.subr.mxu0 %v284
        %392 = vmatpush2.msra.mxu0 %v283
        %393 = vmatprep.subr.mxu0 %v280
        %394 = vmatpush2.msra.mxu0 %v279
        %395 = vmatprep.subr.mxu0 %v276
        %396 = vmatpush2.msra.mxu0 %v275
        %397 = vmatprep.mubr.f32.mxu0 %v329
        %398 = vmatmul.mubr.f32.gmra.mxu0 %v209
        %v399 = vpop.f32.mrf.mxu0
        %v400 = vadd.f32 %v312, %v399
        %v401 = vpop.f32.mrf.mxu0
        %v402 = vadd.f32 %v316, %v401
        %403 = vmatprep.mubr.f32.mxu0 %v331
        %404 = vmatmul.mubr.f32.gmra.mxu0 %v210
        %v405 = vpop.f32.mrf.mxu0
        %v406 = vadd.f32 %v312, %v405
        %v407 = vpop.f32.mrf.mxu0
        %v408 = vadd.f32 %v316, %v407
        %409 = vdwg.mxu0
        %410 = vmatprep.subr.mxu0 %v274
        %411 = vmatpush1.msra.mxu0 %v273
        %412 = vmatprep.subr.mxu0 %v270
        %413 = vmatpush1.msra.mxu0 %v269
        %414 = vmatprep.subr.mxu0 %v266
        %415 = vmatpush1.msra.mxu0 %v265
        %416 = vmatprep.subr.mxu0 %v262
        %417 = vmatpush1.msra.mxu0 %v261
        %418 = vmatprep.subr.mxu0 %v258
        %419 = vmatpush1.msra.mxu0 %v257
        %420 = vmatprep.subr.mxu0 %v254
        %421 = vmatpush1.msra.mxu0 %v253
        %422 = vmatprep.subr.mxu0 %v250
        %423 = vmatpush1.msra.mxu0 %v249
        %424 = vmatprep.subr.mxu0 %v246
        %425 = vmatpush1.msra.mxu0 %v245
        %426 = vmatprep.subr.mxu0 %v242
        %427 = vmatpush1.msra.mxu0 %v241
        %428 = vmatprep.subr.mxu0 %v238
        %429 = vmatpush1.msra.mxu0 %v237
        %430 = vmatprep.subr.mxu0 %v234
        %431 = vmatpush1.msra.mxu0 %v233
        %432 = vmatprep.subr.mxu0 %v230
        %433 = vmatpush1.msra.mxu0 %v229
        %434 = vmatprep.subr.mxu0 %v226
        %435 = vmatpush1.msra.mxu0 %v225
        %436 = vmatprep.subr.mxu0 %v222
        %437 = vmatpush1.msra.mxu0 %v221
        %438 = vmatprep.subr.mxu0 %v218
        %439 = vmatpush1.msra.mxu0 %v217
        %440 = vmatprep.subr.mxu0 %v214
        %441 = vmatpush1.msra.mxu0 %v213
        %442 = vmatprep.subr.mxu0 0.0
        %443 = vmatpush2.msra.mxu0 0.0
        %444 = vmatprep.subr.mxu0 0.0
        %445 = vmatpush2.msra.mxu0 0.0
        %446 = vmatprep.subr.mxu0 0.0
        %447 = vmatpush2.msra.mxu0 0.0
        %448 = vmatprep.subr.mxu0 0.0
        %449 = vmatpush2.msra.mxu0 0.0
        %450 = vmatprep.subr.mxu0 0.0
        %451 = vmatpush2.msra.mxu0 0.0
        %452 = vmatprep.subr.mxu0 0.0
        %453 = vmatpush2.msra.mxu0 0.0
        %454 = vmatprep.subr.mxu0 0.0
        %455 = vmatpush2.msra.mxu0 0.0
        %456 = vmatprep.subr.mxu0 0.0
        %457 = vmatpush2.msra.mxu0 0.0
        %458 = vmatprep.subr.mxu0 %v306
        %459 = vmatpush2.msra.mxu0 %v305
        %460 = vmatprep.subr.mxu0 %v302
        %461 = vmatpush2.msra.mxu0 %v301
        %462 = vmatprep.subr.mxu0 %v298
        %463 = vmatpush2.msra.mxu0 %v297
        %464 = vmatprep.subr.mxu0 %v294
        %465 = vmatpush2.msra.mxu0 %v293
        %466 = vmatprep.subr.mxu0 %v290
        %467 = vmatpush2.msra.mxu0 %v289
        %468 = vmatprep.subr.mxu0 %v286
        %469 = vmatpush2.msra.mxu0 %v285
        %470 = vmatprep.subr.mxu0 %v282
        %471 = vmatpush2.msra.mxu0 %v281
        %472 = vmatprep.subr.mxu0 %v278
        %473 = vmatpush2.msra.mxu0 %v277
        %474 = vmatprep.mubr.f32.mxu0 %v329
        %475 = vmatmul.mubr.f32.gmra.mxu0 %v209
        %v476 = vpop.f32.mrf.mxu0
        %v477 = vadd.f32 %v320, %v476
        %v478 = vpop.f32.mrf.mxu0
        %v479 = vadd.f32 %v324, %v478
        %480 = vmatprep.mubr.f32.mxu0 %v331
        %481 = vmatmul.mubr.f32.gmra.mxu0 %v210
        %v482 = vpop.f32.mrf.mxu0
        %v483 = vadd.f32 %v320, %v482
        %v484 = vpop.f32.mrf.mxu0
        %v485 = vadd.f32 %v324, %v484
        %486 = vdwg.mxu0
        %487 = vst [vmem:[%s178] sm:$0xff] %v400
        %488 = vst [vmem:[%s178 + $0x8] sm:$0xff] %v402
        %489 = vst [vmem:[%s178 + $0x10] sm:$0xff] %v477
        %490 = vst [vmem:[%s178 + $0x18] sm:$0xff] %v479
        %491 = vst [vmem:[%s178 + $0x20] sm:$0xff] %v406
        %492 = vst [vmem:[%s178 + $0x28] sm:$0xff] %v408
        %493 = vst [vmem:[%s178 + $0x30] sm:$0xff] %v483
        %494 = vst [vmem:[%s178 + $0x38] sm:$0xff] %v485
        %s495 = sand.u32 %s94, 1
        %s496 = scalar_lea.sflag [#allocation4], %s495
        %s497 = sand.u32 %s94, 1
        %s498 = smul.addr %s497, 64
        %s499 = scalar_lea.vmem [#allocation5], %s498
        // Predicated region
        $region37: #{tpu_custom_call.1} parent=31 // pred_check
          %p500 = pneg %p104
        $region38: #{tpu_custom_call.1} parent=31 // pred_check_branch
          %502 = sbr.rel (%p500) target = $region40
        $region39: #{tpu_custom_call.1} parent=31 // pred_region
          %s504 = ssub.s32 1024, 1024
          %505 = vsyncadd %s496, %s504
          %s506 = smul.addr %s18, 8
          %s507 = smul.addr %s506, 128
          %s508 = scalar_lea.hbm %s3, %s507
          %s509 = sshll.u32 %s499, 4
          %s510 = int_to_ptr.vmem [resolvable:$true] %s509
          %515 = dma.vmem_to_hbm [thread:$0]  %s510, 1024, %s508, %s496, 512, 512, 32
        $region40: #{tpu_custom_call.1} parent=31 // pred_fallthru
          _
      $region32: #{tpu_custom_call.1} parent=5 // pred_fallthru
        _
      %p516 = scmp.le.s32.totalorder 2, %s13
      // Predicated region
      $region41: #{tpu_custom_call.1} parent=5 // pred_check
        %p517 = pneg %p516
      $region42: #{tpu_custom_call.1} parent=5 // pred_check_branch
        %519 = sbr.rel (%p517) target = $region44
      $region43: #{tpu_custom_call.1} parent=5 // pred_region
        %s520 = ssub.s32 %s13, 2
        // Predicated region
        $region45: #{tpu_custom_call.1} parent=43 // pred_check
          %p521 = pneg %p110
        $region46: #{tpu_custom_call.1} parent=43 // pred_check_branch
          %523 = sbr.rel (%p521) target = $region48
        $region47: #{tpu_custom_call.1} parent=43 // pred_region
          %s524 = sand.u32 %s95, 1
          %s525 = scalar_lea.sflag [#allocation4], %s524
          %s526 = sand.u32 %s95, 1
          %s527 = smul.addr %s526, 64
          %s528 = scalar_lea.vmem [#allocation5], %s527
          %529 = dma.done %s525, 1024
        $region48: #{tpu_custom_call.1} parent=43 // pred_fallthru
          _
      $region44: #{tpu_custom_call.1} parent=5 // pred_fallthru
        _
    $region6: #{tpu_custom_call.1} parent=1 // loop_footer
      %s17 = sadd.s32 1, %s13
    $region7: #{tpu_custom_call.1} parent=1 // loop_footer_branch
      %12 = sbr.rel target = $region3
    $region8: #{tpu_custom_call.1} parent=1 // loop_exit
      _
    %530 = vsyncpa [#allocation3], 1
    %s531 = scalar_lea.sflag [#allocation3], 1
    %532 = vsyncpa %s531, 1
    %533 = vsyncpa [#allocation4], 1
    %s534 = scalar_lea.sflag [#allocation4], 1
    %535 = vsyncpa %s534, 1

</llo_original>
